<compile_context>
chip_gen: v6e
topology: v6e:2x2x1
jax: 0.10.0
libtpu: 0.0.40
codegen_flags: <defaults>
</compile_context>

<pallas_src>
import jax
import jax.numpy as jnp
from jax.experimental import pallas as pl
from jax.experimental.pallas import tpu as pltpu


# ---------------------------------------------------------------------------
# Kernel: fused concat (lane axis) + relu.  One HBM read of x1/x2, one HBM
# write of the output -- the concatenated tensor is never materialized in HBM.
# ---------------------------------------------------------------------------
def _make_cat_relu_kernel(d1, d2, lane_aligned):
    def kernel(x1_ref, x2_ref, o_ref):
        zero = jnp.zeros((), o_ref.dtype)
        if lane_aligned:
            # d1 % 128 == 0: both stores start lane-aligned (unmasked vst).
            o_ref[:, 0:d1] = jnp.maximum(x1_ref[...], zero).astype(o_ref.dtype)
            o_ref[:, d1:d1 + d2] = jnp.maximum(x2_ref[...], zero).astype(o_ref.dtype)
        else:
            # Unaligned boundary: concatenate inside VMEM (XLU/VALU work,
            # hidden under the DMA) and do a single lane-dense full store.
            cat = jnp.concatenate([x1_ref[...], x2_ref[...]], axis=1)
            o_ref[...] = jnp.maximum(cat, zero).astype(o_ref.dtype)
    return kernel


# ---------------------------------------------------------------------------
# Tiling helpers
# ---------------------------------------------------------------------------
def _vmem_capacity_bytes():
    try:
        return int(pltpu.get_tpu_info().vmem_capacity_bytes)
    except Exception:
        return 64 << 20  # conservative default (v7x-sized)


def _sublane_pack(itemsize):
    # Rows pack along sublanes: f32 -> 8, bf16 -> 16, int8/fp8 -> 32.
    return max(8, 32 // max(int(itemsize), 1))


def _pick_tile_rows(b, d_out, itemsize, budget_bytes, pack):
    """Largest sublane-aligned row tile whose (inputs + output) double-buffered
    footprint fits the budget.  Returns None if even a minimal tile can't fit."""
    bytes_per_row = 4 * d_out * itemsize        # (in + out) * 2 pipeline buffers
    tb = budget_bytes // max(bytes_per_row, 1)
    if tb < pack:
        return None
    if tb >= b:
        # Whole tensor fits in one block.  For large tensors split into >= 2
        # balanced blocks so both v7x TensorCores get work (harmless on
        # v5e/v6e: one extra ~0.35 us step).
        if b >= 2 * pack and b * d_out * itemsize >= (4 << 20):
            half = -(-b // 2)
            return -(-half // pack) * pack
        return b
    return (tb // pack) * pack


# ---------------------------------------------------------------------------
# Wrapper
# ---------------------------------------------------------------------------
def cat_relu(x1, x2, *, force_pallas=False):
    """relu(concat([x1, x2], axis=1))."""
    assert x1.shape[0] == x2.shape[0], "concat along dim=1 needs matching dim 0"
    assert x1.dtype == x2.dtype
    b, d1 = x1.shape
    d2 = x2.shape[1]
    d_out = d1 + d2
    itemsize = jnp.dtype(x1.dtype).itemsize

    def xla_fused():
        return jnp.maximum(jnp.concatenate([x1, x2], axis=1),
                           jnp.zeros((), x1.dtype))

    # Tiny problems: launch + per-step overhead dwarfs the data movement.
    total_bytes = 2 * b * d_out * itemsize
    if not force_pallas and total_bytes < (4 << 20):
        return xla_fused()

    capacity = _vmem_capacity_bytes()
    # Tiling budget: ~1/3 of physical VMEM, clamped to [16 MiB, 48 MiB]:
    #   v5e/v6e (128 MiB) -> ~42 MiB (output blocks up to ~10 MiB)
    #   v7x     (64 MiB)  -> ~21 MiB (output blocks up to ~5 MiB)
    budget = min(48 << 20, max(16 << 20, capacity // 3))
    pack = _sublane_pack(itemsize)
    tb = _pick_tile_rows(b, d_out, itemsize, budget, pack)
    if tb is None:
        # TODO(synk): column-tile (second grid axis over 128-lane blocks) for
        # pathologically wide rows; fall back to the XLA-fused op for now.
        return xla_fused()

    grid = (pl.cdiv(b, tb),)
    needed = 4 * tb * d_out * itemsize          # double-buffered in + out
    vmem_limit = int(min((capacity * 3) // 4, max(needed + (4 << 20), 32 << 20)))
    compiler_params = pltpu.CompilerParams(
        dimension_semantics=("parallel",),
        vmem_limit_bytes=vmem_limit,
    )

    kernel = _make_cat_relu_kernel(d1, d2, lane_aligned=(d1 % 128 == 0))
    return pl.pallas_call(
        kernel,
        out_shape=jax.ShapeDtypeStruct((b, d_out), x1.dtype),
        grid=grid,
        in_specs=[
            pl.BlockSpec((tb, d1), lambda i: (i, 0)),
            pl.BlockSpec((tb, d2), lambda i: (i, 0)),
        ],
        out_specs=pl.BlockSpec((tb, d_out), lambda i: (i, 0)),
        compiler_params=compiler_params,
    )(x1, x2)


def model_forward(x1, x2, *, force_pallas=False):
    x3 = cat_relu(x1, x2, force_pallas=force_pallas)
    # Mirror the PyTorch module's static shape check:
    #   return x3 if x1.shape[0] == 1 else x3.view(-1)
    if x1.shape[0] == 1:
        return x3
    return x3.reshape(-1)   # metadata-only on contiguous row-major output


# ---------------------------------------------------------------------------
# Demo / self-check
# ---------------------------------------------------------------------------
if __name__ == "__main__":
    key = jax.random.PRNGKey(0)
    k1, k2, k3, k4 = jax.random.split(key, 4)

    # Aligned concat boundary (d1 % 128 == 0); force the Pallas path so the
    # fused kernel is actually exercised at demo sizes.
    x1 = jax.random.normal(k1, (2, 128), dtype=jnp.float32)
    x2 = jax.random.normal(k2, (2, 128), dtype=jnp.float32)
    out = jax.block_until_ready(model_forward(x1, x2, force_pallas=True))
    ref = jnp.maximum(jnp.concatenate([x1, x2], axis=1), 0.0).reshape(-1)
    assert out.shape == ref.shape, (out.shape, ref.shape)
    assert jnp.allclose(out, ref), "mismatch vs reference (aligned path)"

    # Unaligned concat boundary (d1 % 128 != 0): in-kernel concatenate path,
    # still a single fused pallas_call (no HBM round-trip).
    x1b = jax.random.normal(k3, (2, 64), dtype=jnp.float32)
    x2b = jax.random.normal(k4, (2, 192), dtype=jnp.float32)
    outb = jax.block_until_ready(model_forward(x1b, x2b, force_pallas=True))
    refb = jnp.maximum(jnp.concatenate([x1b, x2b], axis=1), 0.0).reshape(-1)
    assert outb.shape == refb.shape, (outb.shape, refb.shape)
    assert jnp.allclose(outb, refb), "mismatch vs reference (unaligned path)"

    # Literal-module-sized inputs (batch=2, features=3) take the tiny bypass.
    x1c = jax.random.normal(k1, (2, 3), dtype=jnp.float32)
    x2c = jax.random.normal(k2, (2, 3), dtype=jnp.float32)
    outc = jax.block_until_ready(model_forward(x1c, x2c))
    refc = jnp.maximum(jnp.concatenate([x1c, x2c], axis=1), 0.0).reshape(-1)
    assert jnp.allclose(outc, refc), "mismatch vs reference (bypass path)"

    # x1.shape[0] == 1 branch keeps the 2-D output.
    x1d = jax.random.normal(k3, (1, 128), dtype=jnp.float32)
    x2d = jax.random.normal(k4, (1, 128), dtype=jnp.float32)
    outd = jax.block_until_ready(model_forward(x1d, x2d, force_pallas=True))
    refd = jnp.maximum(jnp.concatenate([x1d, x2d], axis=1), 0.0)
    assert outd.shape == (1, 256) and jnp.allclose(outd, refd)

    print("KERNEL_OK")
</pallas_src>

<mosaic_0001>
module attributes {stable_mosaic.version = 11 : i64} {
  func.func @kernel(%arg0: i32, %arg1: memref<2x128xf32, #tpu.memory_space<vmem>>, %arg2: memref<2x128xf32, #tpu.memory_space<vmem>>, %arg3: memref<2x256xf32, #tpu.memory_space<vmem>>) attributes {dimension_semantics = [#tpu.dimension_semantics<parallel>], iteration_bounds = array<i64: 1>, scalar_prefetch = 0 : i64, scratch_operands = 0 : i64, tpu.core_type = #tpu.core_type<tc>, window_params = [{transform_indices = @transform_0, window_bounds = array<i64: 2, 128>}, {transform_indices = @transform_1, window_bounds = array<i64: 2, 128>}, {transform_indices = @transform_2, window_bounds = array<i64: 2, 256>}]} {
    %c0 = arith.constant 0 : index
    %c0_0 = arith.constant 0 : index
    %0 = vector.load %arg1[%c0, %c0_0] : memref<2x128xf32, #tpu.memory_space<vmem>>, vector<2x128xf32>
    %cst = arith.constant 0.000000e+00 : f32
    %1 = vector.broadcast %cst : f32 to vector<2x128xf32>
    %2 = arith.maximumf %0, %1 : vector<2x128xf32>
    %c0_1 = arith.constant 0 : index
    %c0_2 = arith.constant 0 : index
    %3 = vector.load %arg3[%c0_1, %c0_2] : memref<2x256xf32, #tpu.memory_space<vmem>>, vector<2x128xf32>
    tpu.vector_store %arg3[%c0_1, %c0_2], %2 {strides = array<i32>} : memref<2x256xf32, #tpu.memory_space<vmem>>, vector<2x128xf32>,
    %c0_3 = arith.constant 0 : index
    %c0_4 = arith.constant 0 : index
    %4 = vector.load %arg2[%c0_3, %c0_4] : memref<2x128xf32, #tpu.memory_space<vmem>>, vector<2x128xf32>
    %cst_5 = arith.constant 0.000000e+00 : f32
    %5 = vector.broadcast %cst_5 : f32 to vector<2x128xf32>
    %6 = arith.maximumf %4, %5 : vector<2x128xf32>
    %c0_6 = arith.constant 0 : index
    %c128 = arith.constant 128 : index
    %7 = vector.load %arg3[%c0_6, %c128] : memref<2x256xf32, #tpu.memory_space<vmem>>, vector<2x128xf32>
    tpu.vector_store %arg3[%c0_6, %c128], %6 {strides = array<i32>} : memref<2x256xf32, #tpu.memory_space<vmem>>, vector<2x128xf32>,
    return
  }
  func.func @transform_0(%arg0: i32) -> (i32, i32) {
    %c0_i32 = arith.constant 0 : i32
    %c0_i32_0 = arith.constant 0 : i32
    return %arg0, %c0_i32 : i32, i32
  }
  func.func @transform_1(%arg0: i32) -> (i32, i32) {
    %c0_i32 = arith.constant 0 : i32
    %c0_i32_0 = arith.constant 0 : i32
    return %arg0, %c0_i32 : i32, i32
  }
  func.func @transform_2(%arg0: i32) -> (i32, i32) {
    %c0_i32 = arith.constant 0 : i32
    %c0_i32_0 = arith.constant 0 : i32
    return %arg0, %c0_i32 : i32, i32
  }
}

</mosaic_0001>

<llo_original>
// kernel: tpu_custom_call.1
$region0: #{tpu_custom_call.1}
  #allocation0 [shape = 'u32[]', space=smem, size = 0x4, offset = 0x4, fixed_abs, tag = 'smem constant byte address 0x4 - core index']
  #allocation1 [shape = 'u32[144,128]{1,0:T(1,128)}', space=vmem, size = 0x12000, scoped, tag = 'internal scratch']
  %s0 = inlined_call_operand.hbm [shape: f32[2,128], index: 0, kind: input, shape index: {}]
  %s1 = inlined_call_operand.hbm [shape: f32[2,128], index: 1, kind: input, shape index: {}]
  %s2 = inlined_call_operand.hbm [shape: f32[2,256], index: 2, kind: output, shape index: {}]
  %s3 = sld [smem:[#allocation0]]
  $region26: #{tpu_custom_call.1} parent=0
    _
  %s5 = ssub.s32 1, %s3
  %s6 = scalar_select 0, %s5, %s3
  $region1: #{tpu_custom_call.1} parent=0
    #allocation2 [shape = 'u8[1024]{0}', space=vmem, size = 0x400, scoped, tag = 'input window, operand 0, single buffered']
    #allocation3 [shape = 's32[1]{0}', space=sflag, size = 0x4, scoped, tag = 'scoped memory for tpu_custom_call.1']
    #allocation4 [shape = 's32[1]{0}', space=sflag, size = 0x4, scoped, tag = 'scoped memory for tpu_custom_call.1']
    #allocation5 [shape = 'u8[1024]{0}', space=vmem, size = 0x400, scoped, tag = 'input window, operand 1, single buffered']
    #allocation6 [shape = 's32[1]{0}', space=sflag, size = 0x4, scoped, tag = 'scoped memory for tpu_custom_call.1']
    #allocation7 [shape = 'u8[2048]{0}', space=vmem, size = 0x800, scoped, tag = 'output window, operand 0, single buffered']
    %7 = vsyncpa [#allocation3], 0
    %8 = vsyncpa [#allocation6], 0
    %9 = vsyncpa [#allocation4], 0
    // Predicated region
    $region2: #{tpu_custom_call.1} parent=1 // pred_check
      _
    $region3: #{tpu_custom_call.1} parent=1 // pred_check_branch
      %11 = sbr.rel (0) target = $region5
    $region4: #{tpu_custom_call.1} parent=1 // pred_region
      %s13 = ssub.s32 32, 32
      %14 = vsyncadd [#allocation3], %s13
      %s16 = sshll.u32 [#allocation2], 4
      %s17 = int_to_ptr.vmem [resolvable:$true] %s16
      %19 = dma.hbm_to_vmem [thread:$0]  %s0, 32, %s17, [#allocation3]
    $region5: #{tpu_custom_call.1} parent=1 // pred_fallthru
      _
    // Predicated region
    $region6: #{tpu_custom_call.1} parent=1 // pred_check
      _
    $region7: #{tpu_custom_call.1} parent=1 // pred_check_branch
      %21 = sbr.rel (0) target = $region9
    $region8: #{tpu_custom_call.1} parent=1 // pred_region
      %s23 = ssub.s32 32, 32
      %24 = vsyncadd [#allocation6], %s23
      %s26 = sshll.u32 [#allocation5], 4
      %s27 = int_to_ptr.vmem [resolvable:$true] %s26
      %29 = dma.hbm_to_vmem [thread:$0]  %s1, 32, %s27, [#allocation6]
    $region9: #{tpu_custom_call.1} parent=1 // pred_fallthru
      _
    // Predicated region
    $region10: #{tpu_custom_call.1} parent=1 // pred_check
      _
    $region11: #{tpu_custom_call.1} parent=1 // pred_check_branch
      %31 = sbr.rel (0) target = $region13
    $region12: #{tpu_custom_call.1} parent=1 // pred_region
      %32 = dma.done [#allocation3], 32
    $region13: #{tpu_custom_call.1} parent=1 // pred_fallthru
      _
    // Predicated region
    $region14: #{tpu_custom_call.1} parent=1 // pred_check
      _
    $region15: #{tpu_custom_call.1} parent=1 // pred_check_branch
      %34 = sbr.rel (0) target = $region17
    $region16: #{tpu_custom_call.1} parent=1 // pred_region
      %35 = dma.done [#allocation6], 32
    $region17: #{tpu_custom_call.1} parent=1 // pred_fallthru
      _
    %v36 = vld [vmem:[#allocation2] sm:$0x3]
    %v37 = vmax.f32 %v36, 0.0
    %38 = vst [vmem:[#allocation7] sm:$0x3] %v37
    %v39 = vld [vmem:[#allocation5] sm:$0x3]
    %v40 = vmax.f32 %v39, 0.0
    %41 = vst [vmem:[#allocation7 + $0x2] sm:$0x3] %v40
    // Predicated region
    $region18: #{tpu_custom_call.1} parent=1 // pred_check
      _
    $region19: #{tpu_custom_call.1} parent=1 // pred_check_branch
      %43 = sbr.rel (0) target = $region21
    $region20: #{tpu_custom_call.1} parent=1 // pred_region
      %s45 = ssub.s32 64, 64
      %46 = vsyncadd [#allocation4], %s45
      %s48 = sshll.u32 [#allocation7], 4
      %s49 = int_to_ptr.vmem [resolvable:$true] %s48
      %51 = dma.vmem_to_hbm [thread:$0]  %s49, 64, %s2, [#allocation4]
    $region21: #{tpu_custom_call.1} parent=1 // pred_fallthru
      _
    // Predicated region
    $region22: #{tpu_custom_call.1} parent=1 // pred_check
      _
    $region23: #{tpu_custom_call.1} parent=1 // pred_check_branch
      %53 = sbr.rel (0) target = $region25
    $region24: #{tpu_custom_call.1} parent=1 // pred_region
      %54 = dma.done [#allocation4], 64
    $region25: #{tpu_custom_call.1} parent=1 // pred_fallthru
      _
    %55 = vsyncpa [#allocation3], 1
    %56 = vsyncpa [#allocation6], 1
    %57 = vsyncpa [#allocation4], 1

</llo_original>
